<compile_context>
chip_gen: v7x
topology: tpu7x:2x2x1
jax: 0.10.0
libtpu: 0.0.40
codegen_flags: <defaults>
</compile_context>

<pallas_src>
import functools
from typing import List, Optional, Tuple

import jax
import jax.numpy as jnp
from jax.experimental import pallas as pl
from jax.experimental.pallas import tpu as pltpu

LANE = 128      # lane width (last-dim alignment for padded features)
SUBLANE = 8     # f32 sublane width (second-to-last dim alignment for x/out tiles)


def _round_up(x: int, m: int) -> int:
    return ((x + m - 1) // m) * m


def _itemsize(a: jax.Array) -> int:
    return jnp.dtype(a.dtype).itemsize


def _vmem_capacity_bytes() -> int:
    """Per-generation VMEM capacity (v5e/v6e: 128 MiB, v7x: 64 MiB per TC)."""
    try:
        info = pltpu.get_tpu_info()
        cap = getattr(info, "vmem_capacity_bytes", None)
        if cap:
            return int(cap)
    except Exception:
        pass
    return 128 << 20  # conservative v5e/v6e default


# ---------------------------------------------------------------------------
# Kernel: x tile -> L x (bf16 matmul (f32 acc) + f32 bias [+ ReLU]) -> out tile
# ---------------------------------------------------------------------------
def _mlp_kernel(*refs, num_layers: int, final_relu: bool):
    # refs = (x_ref, w0, b0, w1, b1, ..., w_{L-1}, b_{L-1}, o_ref)
    x_ref = refs[0]
    o_ref = refs[-1]
    y = x_ref[...].astype(jnp.float32)                 # [tm, K0_pad] f32
    for li in range(num_layers):                       # statically unrolled
        w_ref = refs[1 + 2 * li]                       # [K_pad, N_pad] (bf16)
        b_ref = refs[2 + 2 * li]                       # [1, N_pad]    (f32)
        y = jnp.dot(y.astype(w_ref.dtype), w_ref[...],
                    preferred_element_type=jnp.float32)
        y = y + b_ref[...].astype(jnp.float32)
        if li != num_layers - 1 or final_relu:
            y = jnp.maximum(y, 0.0)                    # ReLU (not on last layer)
    o_ref[...] = y.astype(o_ref.dtype)


# ---------------------------------------------------------------------------
# Tiling / VMEM planning
# ---------------------------------------------------------------------------
def _choose_m_tiling(m: int, max_tm: int, min_tiles: int) -> Tuple[int, int, int]:
    """Pick (tm, m_pad, n_tiles) so the last tile is nearly full."""
    m_aligned = _round_up(max(m, 1), SUBLANE)
    n_tiles = max(-(-m_aligned // max_tm), min_tiles)
    n_tiles = max(min(n_tiles, m_aligned // SUBLANE), 1)
    tm = _round_up(-(-m_aligned // n_tiles), SUBLANE)
    n_tiles = -(-m_aligned // tm)
    return tm, tm * n_tiles, n_tiles


def _plan(m: int, in_pad: int, out_pad: int, max_n_pad: int, param_bytes: int,
          weight_bufs: int, small_vmem: bool, vmem_budget: int,
          max_tm: int) -> Optional[Tuple[int, int, int, int]]:
    """Returns (tm, m_pad, n_tiles, vmem_limit) or None if weights don't fit."""
    headroom = 4 << 20                                   # compiler scratch etc.
    resident = param_bytes * weight_bufs                 # weight/bias buffers
    # Per-row cost: double-buffered x/out tiles (f32) + inter-layer activation
    # that cannot live in vregs and spills to VMEM (f32).
    per_row = (2 * (in_pad + out_pad) + max_n_pad) * 4
    avail = vmem_budget - resident - headroom
    if avail < per_row * SUBLANE:
        return None
    tm_cap = max(((avail // per_row) // SUBLANE) * SUBLANE, SUBLANE)
    eff_max_tm = max(min(max_tm, tm_cap), SUBLANE)
    # On small-VMEM (v7x-like) chips force >=2 grid steps so both TCs get work.
    min_tiles = 2 if (small_vmem and _round_up(m, SUBLANE) >= 2 * SUBLANE) else 1
    tm, m_pad, n_tiles = _choose_m_tiling(m, eff_max_tm, min_tiles)
    needed = resident + per_row * tm + headroom
    vmem_limit = int(min(max(needed, 32 << 20), vmem_budget))
    return tm, m_pad, n_tiles, vmem_limit


# ---------------------------------------------------------------------------
# pallas_call builder
# ---------------------------------------------------------------------------
def _run_pallas(x2d: jax.Array, weights: List[jax.Array], biases: List[jax.Array],
                plan: Tuple[int, int, int, int], single_buffer_weights: bool,
                final_relu: bool) -> jax.Array:
    tm, m_pad, n_tiles, vmem_limit = plan
    m, in_dim = x2d.shape
    in_pad = weights[0].shape[0]
    out_pad = weights[-1].shape[1]
    num_layers = len(weights)

    x_p = x2d
    if (m_pad, in_pad) != (m, in_dim):
        x_p = jnp.pad(x2d, ((0, m_pad - m), (0, in_pad - in_dim)))

    # Constant index maps -> blocks stay resident in VMEM across grid steps.
    # pl.Buffered(1): single buffer for the resident weights (no prefetch needed).
    w_kwargs = dict(pipeline_mode=pl.Buffered(1)) if single_buffer_weights else {}
    in_specs = [pl.BlockSpec((tm, in_pad), lambda i: (i, 0))]
    flat_params: List[jax.Array] = []
    for w, b in zip(weights, biases):
        in_specs.append(pl.BlockSpec(w.shape, lambda i: (0, 0), **w_kwargs))
        in_specs.append(pl.BlockSpec(b.shape, lambda i: (0, 0), **w_kwargs))
        flat_params += [w, b]
    out_specs = pl.BlockSpec((tm, out_pad), lambda i: (i, 0))

    # Advisory cost estimate (weights counted once: they are resident).
    flops = sum(2 * m_pad * w.shape[0] * w.shape[1] for w in weights)
    bytes_accessed = int(x_p.size) * 4 + m_pad * out_pad * 4
    bytes_accessed += sum(int(w.size) * _itemsize(w) + int(b.size) * _itemsize(b)
                          for w, b in zip(weights, biases))
    cost = pl.CostEstimate(flops=flops, transcendentals=0,
                           bytes_accessed=bytes_accessed)

    kernel = functools.partial(_mlp_kernel, num_layers=num_layers,
                               final_relu=final_relu)
    return pl.pallas_call(
        kernel,
        out_shape=jax.ShapeDtypeStruct((m_pad, out_pad), x2d.dtype),
        grid=(n_tiles,),
        in_specs=in_specs,
        out_specs=out_specs,
        compiler_params=pltpu.CompilerParams(
            dimension_semantics=("parallel",),   # M axis: 2-TC sharding on v7x
            vmem_limit_bytes=vmem_limit,
        ),
        cost_estimate=cost,
    )(x_p, *flat_params)


def _pallas_mlp(x2d: jax.Array, weights: List[jax.Array], biases: List[jax.Array],
                *, final_relu: bool) -> Optional[jax.Array]:
    """All given layers fused in one pallas_call. Returns None if the resident
    weights do not fit the per-generation VMEM budget."""
    m, _ = x2d.shape
    in_pad = weights[0].shape[0]
    out_pad = weights[-1].shape[1]
    max_n_pad = max(w.shape[1] for w in weights)
    param_bytes = sum(int(w.size) * _itemsize(w) + int(b.size) * _itemsize(b)
                      for w, b in zip(weights, biases))

    vmem_cap = _vmem_capacity_bytes()
    small_vmem = vmem_cap <= (64 << 20)              # v7x-like: 64 MiB per TC
    vmem_budget = int(vmem_cap * 0.85)               # leave compiler headroom
    max_tm = 512 if small_vmem else 1024             # measured sweet spot

    # First try single-buffered resident weights; if the runtime rejects a
    # 1-deep pipeline, retry with default double buffering (needs 2x weights).
    for weight_bufs, single_buffer in ((1, True), (2, False)):
        plan = _plan(m, in_pad, out_pad, max_n_pad, param_bytes, weight_bufs,
                     small_vmem, vmem_budget, max_tm)
        if plan is None:
            continue
        try:
            out = _run_pallas(x2d, weights, biases, plan, single_buffer, final_relu)
            return jax.block_until_ready(out)
        except Exception:
            if single_buffer:
                continue
            raise
    return None


def _mlp_forward(x2d: jax.Array, weights: List[jax.Array],
                 biases: List[jax.Array]) -> jax.Array:
    """Returns [m, out_pad]."""
    m = x2d.shape[0]
    out = _pallas_mlp(x2d, weights, biases, final_relu=False)
    if out is not None:
        return out[:m]
    # Weights too large to keep resident: stream layer-by-layer (one
    # pallas_call per layer; each layer's weights must fit VMEM).
    # TODO(synk): add a K/N-split streaming path (reduction grid axis +
    # accumulator scratch + pl.when init/finalize) for single layers that
    # exceed VMEM by themselves.
    y = x2d
    n_layers = len(weights)
    for li, (w, b) in enumerate(zip(weights, biases)):
        relu = li != n_layers - 1
        out = _pallas_mlp(y, [w], [b], final_relu=relu)
        if out is None:
            raise ValueError("Single layer exceeds VMEM budget; "
                             "K/N streaming not implemented.")
        y = out[:m]
    return y


# ---------------------------------------------------------------------------
# flatten/unflatten batch (same semantics as the PyTorch helpers)
# ---------------------------------------------------------------------------
def flatten_batch(x: jax.Array, nonbatch_dims: int = 1):
    if nonbatch_dims > 0:
        batch_dim = x.shape[:-nonbatch_dims]
        x = jnp.reshape(x, (-1,) + x.shape[-nonbatch_dims:])
        return x, batch_dim
    else:
        batch_dim = x.shape
        return jnp.reshape(x, (-1,)), batch_dim


def unflatten_batch(x: jax.Array, batch_dim) -> jax.Array:
    return jnp.reshape(x, tuple(batch_dim) + x.shape[1:])


# ---------------------------------------------------------------------------
# MLP module (JAX/Pallas equivalent of the PyTorch MLP, activation = ReLU)
# ---------------------------------------------------------------------------
class MLP:
    def __init__(self, in_dim: int, out_dim: int, hidden_dim: int,
                 hidden_layers: int, key: jax.Array,
                 matmul_dtype=jnp.bfloat16):
        self.in_dim = in_dim
        self.out_dim = out_dim
        self.hidden_layers = hidden_layers
        self.matmul_dtype = matmul_dtype

        dims = []
        for i in range(hidden_layers):
            dims.append((in_dim if i == 0 else hidden_dim, hidden_dim))
        dims.append((hidden_dim if hidden_layers > 0 else in_dim, out_dim))
        self.logical_dims = dims

        # torch.nn.Linear-style init: U(-1/sqrt(fan_in), 1/sqrt(fan_in)).
        # Weights/biases zero-padded to 128-lane multiples so the kernel only
        # ever sees lane-dense blocks.  Matmul weights stored in bf16 (f32
        # accumulation in-kernel); biases kept in f32.
        self.params_f32: List[Tuple[jax.Array, jax.Array]] = []   # unpadded (reference)
        self.weights_padded: List[jax.Array] = []                  # [K_pad, N_pad] bf16
        self.biases_padded: List[jax.Array] = []                   # [1, N_pad]    f32
        for (fan_in, fan_out) in dims:
            key, wk, bk = jax.random.split(key, 3)
            bound = 1.0 / float(fan_in) ** 0.5
            w = jax.random.uniform(wk, (fan_in, fan_out), dtype=jnp.float32,
                                   minval=-bound, maxval=bound)
            b = jax.random.uniform(bk, (fan_out,), dtype=jnp.float32,
                                   minval=-bound, maxval=bound)
            self.params_f32.append((w, b))
            k_pad = _round_up(fan_in, LANE)
            n_pad = _round_up(fan_out, LANE)
            w_pad = jnp.pad(w, ((0, k_pad - fan_in), (0, n_pad - fan_out)))
            b_pad = jnp.pad(b.reshape(1, fan_out), ((0, 0), (0, n_pad - fan_out)))
            self.weights_padded.append(w_pad.astype(matmul_dtype))
            self.biases_padded.append(b_pad.astype(jnp.float32))

    def __call__(self, x: jax.Array) -> jax.Array:
        x2d, bd = flatten_batch(x, nonbatch_dims=1)
        y = _mlp_forward(x2d.astype(jnp.float32),
                         self.weights_padded, self.biases_padded)
        y = y[:, :self.out_dim]              # drop lane padding
        return unflatten_batch(y, bd)


# ---------------------------------------------------------------------------
# Pure-JAX references
# ---------------------------------------------------------------------------
def _reference_forward(mlp: MLP, x: jax.Array, matmul_dtype=None) -> jax.Array:
    """matmul_dtype=None -> full-f32 reference; else mimics kernel numerics."""
    x2d, bd = flatten_batch(x, nonbatch_dims=1)
    y = x2d.astype(jnp.float32)
    n_layers = len(mlp.params_f32)
    for li, (w, b) in enumerate(mlp.params_f32):
        if matmul_dtype is None:
            yy = jnp.dot(y, w, precision=jax.lax.Precision.HIGHEST)
        else:
            yy = jnp.dot(y.astype(matmul_dtype), w.astype(matmul_dtype),
                         preferred_element_type=jnp.float32)
        y = yy + b
        if li != n_layers - 1:
            y = jnp.maximum(y, 0.0)
    return unflatten_batch(y, bd)


if __name__ == "__main__":
    key = jax.random.PRNGKey(0)
    k_param, k_x = jax.random.split(key)

    # Small shapes: batch dims (2, 4), in_dim=16, hidden_dim=32, out_dim=8
    in_dim, out_dim, hidden_dim, hidden_layers = 16, 8, 32, 2
    mlp = MLP(in_dim, out_dim, hidden_dim, hidden_layers, key=k_param)

    x = jax.random.normal(k_x, (2, 4, in_dim), dtype=jnp.float32)

    y = jax.block_until_ready(mlp(x))
    assert y.shape == (2, 4, out_dim), y.shape

    # Tight check against a reference with matching (bf16-operand) numerics.
    y_ref_bf16 = jax.block_until_ready(
        _reference_forward(mlp, x, matmul_dtype=mlp.matmul_dtype))
    assert jnp.allclose(y, y_ref_bf16, atol=1e-4, rtol=1e-4), \
        "mismatch vs bf16-matched reference"

    # Loose check against the full-f32 reference (bf16 matmul rounding).
    y_ref_f32 = jax.block_until_ready(_reference_forward(mlp, x))
    assert jnp.allclose(y, y_ref_f32, atol=5e-2, rtol=5e-2), \
        "mismatch vs f32 reference"

    print("KERNEL_OK")
</pallas_src>

<mosaic_0001>
module attributes {stable_mosaic.version = 11 : i64} {
  func.func @_mlp_kernel(%arg0: i32, %arg1: memref<8x128xf32, #tpu.memory_space<vmem>>, %arg2: memref<128x128xbf16, #tpu.memory_space<vmem>>, %arg3: memref<1x128xf32, #tpu.memory_space<vmem>>, %arg4: memref<128x128xbf16, #tpu.memory_space<vmem>>, %arg5: memref<1x128xf32, #tpu.memory_space<vmem>>, %arg6: memref<128x128xbf16, #tpu.memory_space<vmem>>, %arg7: memref<1x128xf32, #tpu.memory_space<vmem>>, %arg8: memref<8x128xf32, #tpu.memory_space<vmem>>) attributes {dimension_semantics = [#tpu.dimension_semantics<parallel>], iteration_bounds = array<i64: 1>, scalar_prefetch = 0 : i64, scratch_operands = 0 : i64, tpu.core_type = #tpu.core_type<tc>, window_params = [{transform_indices = @transform_0, window_bounds = array<i64: 8, 128>}, {pipeline_mode = #tpu.pipeline_mode<synchronous>, transform_indices = @transform_1, window_bounds = array<i64: 128, 128>}, {pipeline_mode = #tpu.pipeline_mode<synchronous>, transform_indices = @transform_2, window_bounds = array<i64: 1, 128>}, {pipeline_mode = #tpu.pipeline_mode<synchronous>, transform_indices = @transform_3, window_bounds = array<i64: 128, 128>}, {pipeline_mode = #tpu.pipeline_mode<synchronous>, transform_indices = @transform_4, window_bounds = array<i64: 1, 128>}, {pipeline_mode = #tpu.pipeline_mode<synchronous>, transform_indices = @transform_5, window_bounds = array<i64: 128, 128>}, {pipeline_mode = #tpu.pipeline_mode<synchronous>, transform_indices = @transform_6, window_bounds = array<i64: 1, 128>}, {transform_indices = @transform_7, window_bounds = array<i64: 8, 128>}]} {
    %c0 = arith.constant 0 : index
    %c0_0 = arith.constant 0 : index
    %0 = vector.load %arg1[%c0, %c0_0] : memref<8x128xf32, #tpu.memory_space<vmem>>, vector<8x128xf32>
    %1 = arith.truncf %0 : vector<8x128xf32> to vector<8x128xbf16>
    %c0_1 = arith.constant 0 : index
    %c0_2 = arith.constant 0 : index
    %2 = vector.load %arg2[%c0_1, %c0_2] : memref<128x128xbf16, #tpu.memory_space<vmem>>, vector<128x128xbf16>
    %cst = arith.constant dense<0.000000e+00> : vector<8x128xf32>
    %3 = tpu.matmul %1, %2, %cst {dimension_numbers = #tpu.dot_dimension_numbers<[1], [0], [0], [1], [0, 0, 1, 1], [], []>} : vector<8x128xbf16>, vector<128x128xbf16>, vector<8x128xf32> -> vector<8x128xf32>
    %c0_3 = arith.constant 0 : index
    %c0_4 = arith.constant 0 : index
    %4 = vector.load %arg3[%c0_3, %c0_4] : memref<1x128xf32, #tpu.memory_space<vmem>>, vector<1x128xf32>
    %5 = vector.broadcast %4 : vector<1x128xf32> to vector<8x128xf32>
    %6 = arith.addf %3, %5 : vector<8x128xf32>
    %cst_5 = arith.constant 0.000000e+00 : f32
    %7 = vector.broadcast %cst_5 : f32 to vector<8x128xf32>
    %8 = arith.maximumf %6, %7 : vector<8x128xf32>
    %9 = arith.truncf %8 : vector<8x128xf32> to vector<8x128xbf16>
    %c0_6 = arith.constant 0 : index
    %c0_7 = arith.constant 0 : index
    %10 = vector.load %arg4[%c0_6, %c0_7] : memref<128x128xbf16, #tpu.memory_space<vmem>>, vector<128x128xbf16>
    %cst_8 = arith.constant dense<0.000000e+00> : vector<8x128xf32>
    %11 = tpu.matmul %9, %10, %cst_8 {dimension_numbers = #tpu.dot_dimension_numbers<[1], [0], [0], [1], [0, 0, 1, 1], [], []>} : vector<8x128xbf16>, vector<128x128xbf16>, vector<8x128xf32> -> vector<8x128xf32>
    %c0_9 = arith.constant 0 : index
    %c0_10 = arith.constant 0 : index
    %12 = vector.load %arg5[%c0_9, %c0_10] : memref<1x128xf32, #tpu.memory_space<vmem>>, vector<1x128xf32>
    %13 = vector.broadcast %12 : vector<1x128xf32> to vector<8x128xf32>
    %14 = arith.addf %11, %13 : vector<8x128xf32>
    %cst_11 = arith.constant 0.000000e+00 : f32
    %15 = vector.broadcast %cst_11 : f32 to vector<8x128xf32>
    %16 = arith.maximumf %14, %15 : vector<8x128xf32>
    %17 = arith.truncf %16 : vector<8x128xf32> to vector<8x128xbf16>
    %c0_12 = arith.constant 0 : index
    %c0_13 = arith.constant 0 : index
    %18 = vector.load %arg6[%c0_12, %c0_13] : memref<128x128xbf16, #tpu.memory_space<vmem>>, vector<128x128xbf16>
    %cst_14 = arith.constant dense<0.000000e+00> : vector<8x128xf32>
    %19 = tpu.matmul %17, %18, %cst_14 {dimension_numbers = #tpu.dot_dimension_numbers<[1], [0], [0], [1], [0, 0, 1, 1], [], []>} : vector<8x128xbf16>, vector<128x128xbf16>, vector<8x128xf32> -> vector<8x128xf32>
    %c0_15 = arith.constant 0 : index
    %c0_16 = arith.constant 0 : index
    %20 = vector.load %arg7[%c0_15, %c0_16] : memref<1x128xf32, #tpu.memory_space<vmem>>, vector<1x128xf32>
    %21 = vector.broadcast %20 : vector<1x128xf32> to vector<8x128xf32>
    %22 = arith.addf %19, %21 : vector<8x128xf32>
    %c0_17 = arith.constant 0 : index
    %c0_18 = arith.constant 0 : index
    %23 = vector.load %arg8[%c0_17, %c0_18] : memref<8x128xf32, #tpu.memory_space<vmem>>, vector<8x128xf32>
    tpu.vector_store %arg8[%c0_17, %c0_18], %22 {strides = array<i32>} : memref<8x128xf32, #tpu.memory_space<vmem>>, vector<8x128xf32>,
    return
  }
  func.func @transform_0(%arg0: i32) -> (i32, i32) {
    %c0_i32 = arith.constant 0 : i32
    %c0_i32_0 = arith.constant 0 : i32
    return %arg0, %c0_i32 : i32, i32
  }
  func.func @transform_1(%arg0: i32) -> (i32, i32) {
    %c0_i32 = arith.constant 0 : i32
    %c0_i32_0 = arith.constant 0 : i32
    %c0_i32_1 = arith.constant 0 : i32
    return %c0_i32, %c0_i32_0 : i32, i32
  }
  func.func @transform_2(%arg0: i32) -> (i32, i32) {
    %c0_i32 = arith.constant 0 : i32
    %c0_i32_0 = arith.constant 0 : i32
    %c0_i32_1 = arith.constant 0 : i32
    return %c0_i32, %c0_i32_0 : i32, i32
  }
  func.func @transform_3(%arg0: i32) -> (i32, i32) {
    %c0_i32 = arith.constant 0 : i32
    %c0_i32_0 = arith.constant 0 : i32
    %c0_i32_1 = arith.constant 0 : i32
    return %c0_i32, %c0_i32_0 : i32, i32
  }
  func.func @transform_4(%arg0: i32) -> (i32, i32) {
    %c0_i32 = arith.constant 0 : i32
    %c0_i32_0 = arith.constant 0 : i32
    %c0_i32_1 = arith.constant 0 : i32
    return %c0_i32, %c0_i32_0 : i32, i32
  }
  func.func @transform_5(%arg0: i32) -> (i32, i32) {
    %c0_i32 = arith.constant 0 : i32
    %c0_i32_0 = arith.constant 0 : i32
    %c0_i32_1 = arith.constant 0 : i32
    return %c0_i32, %c0_i32_0 : i32, i32
  }
  func.func @transform_6(%arg0: i32) -> (i32, i32) {
    %c0_i32 = arith.constant 0 : i32
    %c0_i32_0 = arith.constant 0 : i32
    %c0_i32_1 = arith.constant 0 : i32
    return %c0_i32, %c0_i32_0 : i32, i32
  }
  func.func @transform_7(%arg0: i32) -> (i32, i32) {
    %c0_i32 = arith.constant 0 : i32
    %c0_i32_0 = arith.constant 0 : i32
    return %arg0, %c0_i32 : i32, i32
  }
}

module attributes {stable_mosaic.version = 11 : i64} {
  func.func @_mlp_kernel(%arg0: i32, %arg1: memref<8x128xf32, #tpu.memory_space<vmem>>, %arg2: memref<128x128xbf16, #tpu.memory_space<vmem>>, %arg3: memref<1x128xf32, #tpu.memory_space<vmem>>, %arg4: memref<128x128xbf16, #tpu.memory_space<vmem>>, %arg5: memref<1x128xf32, #tpu.memory_space<vmem>>, %arg6: memref<128x128xbf16, #tpu.memory_space<vmem>>, %arg7: memref<1x128xf32, #tpu.memory_space<vmem>>, %arg8: memref<8x128xf32, #tpu.memory_space<vmem>>) attributes {dimension_semantics = [#tpu.dimension_semantics<parallel>], iteration_bounds = array<i64: 1>, scalar_prefetch = 0 : i64, scratch_operands = 0 : i64, tpu.core_type = #tpu.core_type<tc>, window_params = [{transform_indices = @transform_0, window_bounds = array<i64: 8, 128>}, {pipeline_mode = #tpu.pipeline_mode<synchronous>, transform_indices = @transform_1, window_bounds = array<i64: 128, 128>}, {pipeline_mode = #tpu.pipeline_mode<synchronous>, transform_indices = @transform_2, window_bounds = array<i64: 1, 128>}, {pipeline_mode = #tpu.pipeline_mode<synchronous>, transform_indices = @transform_3, window_bounds = array<i64: 128, 128>}, {pipeline_mode = #tpu.pipeline_mode<synchronous>, transform_indices = @transform_4, window_bounds = array<i64: 1, 128>}, {pipeline_mode = #tpu.pipeline_mode<synchronous>, transform_indices = @transform_5, window_bounds = array<i64: 128, 128>}, {pipeline_mode = #tpu.pipeline_mode<synchronous>, transform_indices = @transform_6, window_bounds = array<i64: 1, 128>}, {transform_indices = @transform_7, window_bounds = array<i64: 8, 128>}]} {
    %c0 = arith.constant 0 : index
    %c0_0 = arith.constant 0 : index
    %0 = vector.load %arg1[%c0, %c0_0] : memref<8x128xf32, #tpu.memory_space<vmem>>, vector<8x128xf32>
    %1 = arith.truncf %0 : vector<8x128xf32> to vector<8x128xbf16>
    %c0_1 = arith.constant 0 : index
    %c0_2 = arith.constant 0 : index
    %2 = vector.load %arg2[%c0_1, %c0_2] : memref<128x128xbf16, #tpu.memory_space<vmem>>, vector<128x128xbf16>
    %cst = arith.constant dense<0.000000e+00> : vector<8x128xf32>
    %3 = tpu.matmul %1, %2, %cst {dimension_numbers = #tpu.dot_dimension_numbers<[1], [0], [0], [1], [0, 0, 1, 1], [], []>} : vector<8x128xbf16>, vector<128x128xbf16>, vector<8x128xf32> -> vector<8x128xf32>
    %c0_3 = arith.constant 0 : index
    %c0_4 = arith.constant 0 : index
    %4 = vector.load %arg3[%c0_3, %c0_4] : memref<1x128xf32, #tpu.memory_space<vmem>>, vector<1x128xf32>
    %5 = vector.broadcast %4 : vector<1x128xf32> to vector<8x128xf32>
    %6 = arith.addf %3, %5 : vector<8x128xf32>
    %cst_5 = arith.constant 0.000000e+00 : f32
    %7 = vector.broadcast %cst_5 : f32 to vector<8x128xf32>
    %8 = arith.maximumf %6, %7 : vector<8x128xf32>
    %9 = arith.truncf %8 : vector<8x128xf32> to vector<8x128xbf16>
    %c0_6 = arith.constant 0 : index
    %c0_7 = arith.constant 0 : index
    %10 = vector.load %arg4[%c0_6, %c0_7] : memref<128x128xbf16, #tpu.memory_space<vmem>>, vector<128x128xbf16>
    %cst_8 = arith.constant dense<0.000000e+00> : vector<8x128xf32>
    %11 = tpu.matmul %9, %10, %cst_8 {dimension_numbers = #tpu.dot_dimension_numbers<[1], [0], [0], [1], [0, 0, 1, 1], [], []>} : vector<8x128xbf16>, vector<128x128xbf16>, vector<8x128xf32> -> vector<8x128xf32>
    %c0_9 = arith.constant 0 : index
    %c0_10 = arith.constant 0 : index
    %12 = vector.load %arg5[%c0_9, %c0_10] : memref<1x128xf32, #tpu.memory_space<vmem>>, vector<1x128xf32>
    %13 = vector.broadcast %12 : vector<1x128xf32> to vector<8x128xf32>
    %14 = arith.addf %11, %13 : vector<8x128xf32>
    %cst_11 = arith.constant 0.000000e+00 : f32
    %15 = vector.broadcast %cst_11 : f32 to vector<8x128xf32>
    %16 = arith.maximumf %14, %15 : vector<8x128xf32>
    %17 = arith.truncf %16 : vector<8x128xf32> to vector<8x128xbf16>
    %c0_12 = arith.constant 0 : index
    %c0_13 = arith.constant 0 : index
    %18 = vector.load %arg6[%c0_12, %c0_13] : memref<128x128xbf16, #tpu.memory_space<vmem>>, vector<128x128xbf16>
    %cst_14 = arith.constant dense<0.000000e+00> : vector<8x128xf32>
    %19 = tpu.matmul %17, %18, %cst_14 {dimension_numbers = #tpu.dot_dimension_numbers<[1], [0], [0], [1], [0, 0, 1, 1], [], []>} : vector<8x128xbf16>, vector<128x128xbf16>, vector<8x128xf32> -> vector<8x128xf32>
    %c0_15 = arith.constant 0 : index
    %c0_16 = arith.constant 0 : index
    %20 = vector.load %arg7[%c0_15, %c0_16] : memref<1x128xf32, #tpu.memory_space<vmem>>, vector<1x128xf32>
    %21 = vector.broadcast %20 : vector<1x128xf32> to vector<8x128xf32>
    %22 = arith.addf %19, %21 : vector<8x128xf32>
    %c0_17 = arith.constant 0 : index
    %c0_18 = arith.constant 0 : index
    %23 = vector.load %arg8[%c0_17, %c0_18] : memref<8x128xf32, #tpu.memory_space<vmem>>, vector<8x128xf32>
    tpu.vector_store %arg8[%c0_17, %c0_18], %22 {strides = array<i32>} : memref<8x128xf32, #tpu.memory_space<vmem>>, vector<8x128xf32>,
    return
  }
  func.func @transform_0(%arg0: i32) -> (i32, i32) {
    %c0_i32 = arith.constant 0 : i32
    %c0_i32_0 = arith.constant 0 : i32
    return %arg0, %c0_i32 : i32, i32
  }
  func.func @transform_1(%arg0: i32) -> (i32, i32) {
    %c0_i32 = arith.constant 0 : i32
    %c0_i32_0 = arith.constant 0 : i32
    %c0_i32_1 = arith.constant 0 : i32
    return %c0_i32, %c0_i32_0 : i32, i32
  }
  func.func @transform_2(%arg0: i32) -> (i32, i32) {
    %c0_i32 = arith.constant 0 : i32
    %c0_i32_0 = arith.constant 0 : i32
    %c0_i32_1 = arith.constant 0 : i32
    return %c0_i32, %c0_i32_0 : i32, i32
  }
  func.func @transform_3(%arg0: i32) -> (i32, i32) {
    %c0_i32 = arith.constant 0 : i32
    %c0_i32_0 = arith.constant 0 : i32
    %c0_i32_1 = arith.constant 0 : i32
    return %c0_i32, %c0_i32_0 : i32, i32
  }
  func.func @transform_4(%arg0: i32) -> (i32, i32) {
    %c0_i32 = arith.constant 0 : i32
    %c0_i32_0 = arith.constant 0 : i32
    %c0_i32_1 = arith.constant 0 : i32
    return %c0_i32, %c0_i32_0 : i32, i32
  }
  func.func @transform_5(%arg0: i32) -> (i32, i32) {
    %c0_i32 = arith.constant 0 : i32
    %c0_i32_0 = arith.constant 0 : i32
    %c0_i32_1 = arith.constant 0 : i32
    return %c0_i32, %c0_i32_0 : i32, i32
  }
  func.func @transform_6(%arg0: i32) -> (i32, i32) {
    %c0_i32 = arith.constant 0 : i32
    %c0_i32_0 = arith.constant 0 : i32
    %c0_i32_1 = arith.constant 0 : i32
    return %c0_i32, %c0_i32_0 : i32, i32
  }
  func.func @transform_7(%arg0: i32) -> (i32, i32) {
    %c0_i32 = arith.constant 0 : i32
    %c0_i32_0 = arith.constant 0 : i32
    return %arg0, %c0_i32 : i32, i32
  }
}

</mosaic_0001>

<llo_original>
// kernel: tpu_custom_call.1
$region0: #{tpu_custom_call.1}
  #allocation0 [shape = 'u32[]', space=smem, size = 0x4, offset = 0x4, fixed_abs, tag = 'smem constant byte address 0x4 - core index']
  #allocation1 [shape = 'u32[144,128]{1,0:T(1,128)}', space=vmem, size = 0x12000, scoped, tag = 'internal scratch']
  %s0 = inlined_call_operand.hbm [shape: f32[8,128], index: 0, kind: input, shape index: {}]
  %s1 = inlined_call_operand.hbm [shape: bf16[128,128], index: 1, kind: input, shape index: {}]
  %s2 = inlined_call_operand.vmem [shape: f32[1,128], index: 2, kind: input, shape index: {}]
  %s3 = inlined_call_operand.hbm [shape: bf16[128,128], index: 3, kind: input, shape index: {}]
  %s4 = inlined_call_operand.vmem [shape: f32[1,128], index: 4, kind: input, shape index: {}]
  %s5 = inlined_call_operand.hbm [shape: bf16[128,128], index: 5, kind: input, shape index: {}]
  %s6 = inlined_call_operand.vmem [shape: f32[1,128], index: 6, kind: input, shape index: {}]
  %s7 = inlined_call_operand.hbm [shape: f32[8,128], index: 7, kind: output, shape index: {}]
  %s8 = sld [smem:[#allocation0]]
  $region54: #{tpu_custom_call.1} parent=0
    _
  %s10 = ssub.s32 1, %s8
  %s11 = scalar_select 0, %s10, %s8
  $region1: #{tpu_custom_call.1} parent=0
    #allocation2 [shape = 'u8[4096]{0}', space=vmem, size = 0x1000, scoped, tag = 'input window, operand 0, single buffered']
    #allocation3 [shape = 's32[1]{0}', space=sflag, size = 0x4, scoped, tag = 'scoped memory for tpu_custom_call.1']
    #allocation4 [shape = 's32[1]{0}', space=sflag, size = 0x4, scoped, tag = 'scoped memory for tpu_custom_call.1']
    #allocation5 [shape = 'u8[32768]{0}', space=vmem, size = 0x8000, scoped, tag = 'input window, operand 1, single buffered']
    #allocation6 [shape = 's32[1]{0}', space=sflag, size = 0x4, scoped, tag = 'scoped memory for tpu_custom_call.1']
    #allocation7 [shape = 'u8[32768]{0}', space=vmem, size = 0x8000, scoped, tag = 'input window, operand 3, single buffered']
    #allocation8 [shape = 'u8[32768]{0}', space=vmem, size = 0x8000, scoped, tag = 'input window, operand 5, single buffered']
    #allocation9 [shape = 's32[1]{0}', space=sflag, size = 0x4, scoped, tag = 'scoped memory for tpu_custom_call.1']
    #allocation10 [shape = 'u8[4096]{0}', space=vmem, size = 0x1000, scoped, tag = 'output window, operand 0, single buffered']
    %12 = vsyncpa [#allocation3], 0
    %13 = vsyncpa [#allocation6], 0
    %14 = vsyncpa [#allocation9], 0
    %15 = vsyncpa [#allocation4], 0
    // Predicated region
    $region2: #{tpu_custom_call.1} parent=1 // pred_check
      _
    $region3: #{tpu_custom_call.1} parent=1 // pred_check_branch
      %17 = sbr.rel (0) target = $region5
    $region4: #{tpu_custom_call.1} parent=1 // pred_region
      %s19 = ssub.s32 128, 128
      %20 = vsyncadd [#allocation3], %s19
      %s22 = sshll.u32 [#allocation2], 4
      %s23 = int_to_ptr.vmem [resolvable:$true] %s22
      %25 = dma.hbm_to_vmem [thread:$0]  %s0, 128, %s23, [#allocation3]
    $region5: #{tpu_custom_call.1} parent=1 // pred_fallthru
      _
    // Predicated region
    $region6: #{tpu_custom_call.1} parent=1 // pred_check
      _
    $region7: #{tpu_custom_call.1} parent=1 // pred_check_branch
      %27 = sbr.rel (0) target = $region9
    $region8: #{tpu_custom_call.1} parent=1 // pred_region
      %s29 = ssub.s32 1024, 1024
      %30 = vsyncadd [#allocation6], %s29
      %s31 = sshll.u32 [#allocation5], 4
      %s32 = int_to_ptr.vmem [resolvable:$true] %s31
      %37 = dma.hbm_to_vmem [thread:$0]  %s1, 1024, %s32, [#allocation6], 64, 64, 4
    $region9: #{tpu_custom_call.1} parent=1 // pred_fallthru
      _
    // Predicated region
    $region10: #{tpu_custom_call.1} parent=1 // pred_check
      _
    $region11: #{tpu_custom_call.1} parent=1 // pred_check_branch
      %39 = sbr.rel (0) target = $region13
    $region12: #{tpu_custom_call.1} parent=1 // pred_region
      _
    $region13: #{tpu_custom_call.1} parent=1 // pred_fallthru
      _
    // Predicated region
    $region14: #{tpu_custom_call.1} parent=1 // pred_check
      _
    $region15: #{tpu_custom_call.1} parent=1 // pred_check_branch
      %41 = sbr.rel (0) target = $region17
    $region16: #{tpu_custom_call.1} parent=1 // pred_region
      %s43 = ssub.s32 1024, 1024
      %44 = vsyncadd [#allocation6], %s43
      %s45 = sshll.u32 [#allocation7], 4
      %s46 = int_to_ptr.vmem [resolvable:$true] %s45
      %51 = dma.hbm_to_vmem [thread:$0]  %s3, 1024, %s46, [#allocation6], 64, 64, 4
    $region17: #{tpu_custom_call.1} parent=1 // pred_fallthru
      _
    // Predicated region
    $region18: #{tpu_custom_call.1} parent=1 // pred_check
      _
    $region19: #{tpu_custom_call.1} parent=1 // pred_check_branch
      %53 = sbr.rel (0) target = $region21
    $region20: #{tpu_custom_call.1} parent=1 // pred_region
      _
    $region21: #{tpu_custom_call.1} parent=1 // pred_fallthru
      _
    // Predicated region
    $region22: #{tpu_custom_call.1} parent=1 // pred_check
      _
    $region23: #{tpu_custom_call.1} parent=1 // pred_check_branch
      %55 = sbr.rel (0) target = $region25
    $region24: #{tpu_custom_call.1} parent=1 // pred_region
      %s57 = ssub.s32 1024, 1024
      %58 = vsyncadd [#allocation9], %s57
      %s59 = sshll.u32 [#allocation8], 4
      %s60 = int_to_ptr.vmem [resolvable:$true] %s59
      %65 = dma.hbm_to_vmem [thread:$0]  %s5, 1024, %s60, [#allocation9], 64, 64, 4
    $region25: #{tpu_custom_call.1} parent=1 // pred_fallthru
      _
    // Predicated region
    $region26: #{tpu_custom_call.1} parent=1 // pred_check
      _
    $region27: #{tpu_custom_call.1} parent=1 // pred_check_branch
      %67 = sbr.rel (0) target = $region29
    $region28: #{tpu_custom_call.1} parent=1 // pred_region
      _
    $region29: #{tpu_custom_call.1} parent=1 // pred_fallthru
      _
    // Predicated region
    $region30: #{tpu_custom_call.1} parent=1 // pred_check
      _
    $region31: #{tpu_custom_call.1} parent=1 // pred_check_branch
      %69 = sbr.rel (0) target = $region33
    $region32: #{tpu_custom_call.1} parent=1 // pred_region
      %70 = dma.done [#allocation3], 128
    $region33: #{tpu_custom_call.1} parent=1 // pred_fallthru
      _
    // Predicated region
    $region34: #{tpu_custom_call.1} parent=1 // pred_check
      _
    $region35: #{tpu_custom_call.1} parent=1 // pred_check_branch
      %72 = sbr.rel (0) target = $region37
    $region36: #{tpu_custom_call.1} parent=1 // pred_region
      %73 = dma.done [#allocation6], 1024
    $region37: #{tpu_custom_call.1} parent=1 // pred_fallthru
      _
    // Predicated region
    $region38: #{tpu_custom_call.1} parent=1 // pred_check
      _
    $region39: #{tpu_custom_call.1} parent=1 // pred_check_branch
      %75 = sbr.rel (0) target = $region41
    $region40: #{tpu_custom_call.1} parent=1 // pred_region
      %76 = dma.done [#allocation6], 1024
    $region41: #{tpu_custom_call.1} parent=1 // pred_fallthru
      _
    // Predicated region
    $region42: #{tpu_custom_call.1} parent=1 // pred_check
      _
    $region43: #{tpu_custom_call.1} parent=1 // pred_check_branch
      %78 = sbr.rel (0) target = $region45
    $region44: #{tpu_custom_call.1} parent=1 // pred_region
      %79 = dma.done [#allocation9], 1024
    $region45: #{tpu_custom_call.1} parent=1 // pred_fallthru
      _
    %v81 = vld [vmem:[#allocation2] sm:$0xff]
    %v82 = vpack.c.bf16 %v81, %v81
    %v83 = vld [vmem:[#allocation5] sm:$0xf]
    %v84 = vld [vmem:[#allocation5 + $0x4] sm:$0xf]
    %v85 = vld [vmem:[#allocation5 + $0x8] sm:$0xf]
    %v86 = vld [vmem:[#allocation5 + $0xc] sm:$0xf]
    %v87 = vld [vmem:[#allocation5 + $0x10] sm:$0xf]
    %v88 = vld [vmem:[#allocation5 + $0x14] sm:$0xf]
    %v89 = vld [vmem:[#allocation5 + $0x18] sm:$0xf]
    %v90 = vld [vmem:[#allocation5 + $0x1c] sm:$0xf]
    %v91 = vld [vmem:[#allocation5 + $0x20] sm:$0xf]
    %v92 = vld [vmem:[#allocation5 + $0x24] sm:$0xf]
    %v93 = vld [vmem:[#allocation5 + $0x28] sm:$0xf]
    %v94 = vld [vmem:[#allocation5 + $0x2c] sm:$0xf]
    %v95 = vld [vmem:[#allocation5 + $0x30] sm:$0xf]
    %v96 = vld [vmem:[#allocation5 + $0x34] sm:$0xf]
    %v97 = vld [vmem:[#allocation5 + $0x38] sm:$0xf]
    %v98 = vld [vmem:[#allocation5 + $0x3c] sm:$0xf]
    %v99 = vld [vmem:[%s2] sm:$0x1]
    %v101 = vlaneseq
    %v102 = vshrl.u32 %v101, 7
    %v103 = vsub.s32 0, %v102
    %v104 = vrot.slane %v99, %v103
    %v122 = vunpack.c.l.b16 %v83
    %v123 = vunpack.c.l.b16 %v84
    %v124 = vunpack.c.l.b16 %v85
    %v125 = vunpack.c.l.b16 %v86
    %v126 = vunpack.c.l.b16 %v87
    %v127 = vunpack.c.l.b16 %v88
    %v128 = vunpack.c.l.b16 %v89
    %v129 = vunpack.c.l.b16 %v90
    %v130 = vunpack.c.l.b16 %v91
    %v131 = vunpack.c.l.b16 %v92
    %v132 = vunpack.c.l.b16 %v93
    %v133 = vunpack.c.l.b16 %v94
    %v134 = vunpack.c.l.b16 %v95
    %v135 = vunpack.c.l.b16 %v96
    %v136 = vunpack.c.l.b16 %v97
    %v137 = vunpack.c.l.b16 %v98
    %v138 = vpack.c.b16 %v123, %v122
    %v139 = vpack.c.b16 %v125, %v124
    %v140 = vpack.c.b16 %v127, %v126
    %v141 = vpack.c.b16 %v129, %v128
    %v142 = vpack.c.b16 %v131, %v130
    %v143 = vpack.c.b16 %v133, %v132
    %v144 = vpack.c.b16 %v135, %v134
    %v145 = vpack.c.b16 %v137, %v136
    %154 = vmatprep.subr.bf16.mxu0 0
    %155 = vmatpush1.bf16.msra.mxu0 %v138
    %156 = vmatprep.subr.bf16.mxu0 0
    %157 = vmatpush1.bf16.msra.mxu0 %v139
    %158 = vmatprep.subr.bf16.mxu0 0
    %159 = vmatpush1.bf16.msra.mxu0 %v140
    %160 = vmatprep.subr.bf16.mxu0 0
    %161 = vmatpush1.bf16.msra.mxu0 %v141
    %162 = vmatprep.subr.bf16.mxu0 0
    %163 = vmatpush1.bf16.msra.mxu0 %v142
    %164 = vmatprep.subr.bf16.mxu0 0
    %165 = vmatpush1.bf16.msra.mxu0 %v143
    %166 = vmatprep.subr.bf16.mxu0 0
    %167 = vmatpush1.bf16.msra.mxu0 %v144
    %168 = vmatprep.subr.bf16.mxu0 0
    %169 = vmatpush1.bf16.msra.mxu0 %v145
    %170 = vmatprep.subr.bf16.mxu0 0
    %171 = vmatpush1.bf16.msra.mxu0 0
    %172 = vmatprep.subr.bf16.mxu0 0
    %173 = vmatpush1.bf16.msra.mxu0 0
    %174 = vmatprep.subr.bf16.mxu0 0
    %175 = vmatpush1.bf16.msra.mxu0 0
    %176 = vmatprep.subr.bf16.mxu0 0
    %177 = vmatpush1.bf16.msra.mxu0 0
    %178 = vmatprep.subr.bf16.mxu0 0
    %179 = vmatpush1.bf16.msra.mxu0 0
    %180 = vmatprep.subr.bf16.mxu0 0
    %181 = vmatpush1.bf16.msra.mxu0 0
    %182 = vmatprep.subr.bf16.mxu0 0
    %183 = vmatpush1.bf16.msra.mxu0 0
    %184 = vmatprep.subr.bf16.mxu0 0
    %185 = vmatpush1.bf16.msra.mxu0 0
    %186 = vmatprep.mubr.bf16.mxu0 0
    %187 = vmatmul.mubr.bf16.gmra.mrb[0].mxu0 %v82
    %v188 = vpop.f32.mrb[0].mxu0
    %v189 = vadd.f32 %v104, %v188
    %v190 = vpop.f32.mrb[0].mxu0
    %v191 = vpop.f32.mrb[0].mxu0
    %v192 = vpop.f32.mrb[0].mxu0
    %193 = vdwg.mxu0
    %v194 = vmax.f32 %v189, 0.0
    %v195 = vpack.c.bf16 %v194, %v194
    %v196 = vld [vmem:[#allocation7] sm:$0xf]
    %v197 = vld [vmem:[#allocation7 + $0x4] sm:$0xf]
    %v198 = vld [vmem:[#allocation7 + $0x8] sm:$0xf]
    %v199 = vld [vmem:[#allocation7 + $0xc] sm:$0xf]
    %v200 = vld [vmem:[#allocation7 + $0x10] sm:$0xf]
    %v201 = vld [vmem:[#allocation7 + $0x14] sm:$0xf]
    %v202 = vld [vmem:[#allocation7 + $0x18] sm:$0xf]
    %v203 = vld [vmem:[#allocation7 + $0x1c] sm:$0xf]
    %v204 = vld [vmem:[#allocation7 + $0x20] sm:$0xf]
    %v205 = vld [vmem:[#allocation7 + $0x24] sm:$0xf]
    %v206 = vld [vmem:[#allocation7 + $0x28] sm:$0xf]
    %v207 = vld [vmem:[#allocation7 + $0x2c] sm:$0xf]
    %v208 = vld [vmem:[#allocation7 + $0x30] sm:$0xf]
    %v209 = vld [vmem:[#allocation7 + $0x34] sm:$0xf]
    %v210 = vld [vmem:[#allocation7 + $0x38] sm:$0xf]
    %v211 = vld [vmem:[#allocation7 + $0x3c] sm:$0xf]
    %v212 = vld [vmem:[%s4] sm:$0x1]
    %v214 = vlaneseq
    %v215 = vshrl.u32 %v214, 7
    %v216 = vsub.s32 0, %v215
    %v217 = vrot.slane %v212, %v216
    %v235 = vunpack.c.l.b16 %v196
    %v236 = vunpack.c.l.b16 %v197
    %v237 = vunpack.c.l.b16 %v198
    %v238 = vunpack.c.l.b16 %v199
    %v239 = vunpack.c.l.b16 %v200
    %v240 = vunpack.c.l.b16 %v201
    %v241 = vunpack.c.l.b16 %v202
    %v242 = vunpack.c.l.b16 %v203
    %v243 = vunpack.c.l.b16 %v204
    %v244 = vunpack.c.l.b16 %v205
    %v245 = vunpack.c.l.b16 %v206
    %v246 = vunpack.c.l.b16 %v207
    %v247 = vunpack.c.l.b16 %v208
    %v248 = vunpack.c.l.b16 %v209
    %v249 = vunpack.c.l.b16 %v210
    %v250 = vunpack.c.l.b16 %v211
    %v251 = vpack.c.b16 %v236, %v235
    %v252 = vpack.c.b16 %v238, %v237
    %v253 = vpack.c.b16 %v240, %v239
    %v254 = vpack.c.b16 %v242, %v241
    %v255 = vpack.c.b16 %v244, %v243
    %v256 = vpack.c.b16 %v246, %v245
    %v257 = vpack.c.b16 %v248, %v247
    %v258 = vpack.c.b16 %v250, %v249
    %267 = vmatprep.subr.bf16.mxu0 0
    %268 = vmatpush1.bf16.msra.mxu0 %v251
    %269 = vmatprep.subr.bf16.mxu0 0
    %270 = vmatpush1.bf16.msra.mxu0 %v252
    %271 = vmatprep.subr.bf16.mxu0 0
    %272 = vmatpush1.bf16.msra.mxu0 %v253
    %273 = vmatprep.subr.bf16.mxu0 0
    %274 = vmatpush1.bf16.msra.mxu0 %v254
    %275 = vmatprep.subr.bf16.mxu0 0
    %276 = vmatpush1.bf16.msra.mxu0 %v255
    %277 = vmatprep.subr.bf16.mxu0 0
    %278 = vmatpush1.bf16.msra.mxu0 %v256
    %279 = vmatprep.subr.bf16.mxu0 0
    %280 = vmatpush1.bf16.msra.mxu0 %v257
    %281 = vmatprep.subr.bf16.mxu0 0
    %282 = vmatpush1.bf16.msra.mxu0 %v258
    %283 = vmatprep.subr.bf16.mxu0 0
    %284 = vmatpush1.bf16.msra.mxu0 0
    %285 = vmatprep.subr.bf16.mxu0 0
    %286 = vmatpush1.bf16.msra.mxu0 0
    %287 = vmatprep.subr.bf16.mxu0 0
    %288 = vmatpush1.bf16.msra.mxu0 0
    %289 = vmatprep.subr.bf16.mxu0 0
    %290 = vmatpush1.bf16.msra.mxu0 0
    %291 = vmatprep.subr.bf16.mxu0 0
    %292 = vmatpush1.bf16.msra.mxu0 0
    %293 = vmatprep.subr.bf16.mxu0 0
    %294 = vmatpush1.bf16.msra.mxu0 0
    %295 = vmatprep.subr.bf16.mxu0 0
    %296 = vmatpush1.bf16.msra.mxu0 0
    %297 = vmatprep.subr.bf16.mxu0 0
    %298 = vmatpush1.bf16.msra.mxu0 0
    %299 = vmatprep.mubr.bf16.mxu0 0
    %300 = vmatmul.mubr.bf16.gmra.mrb[0].mxu0 %v195
    %v301 = vpop.f32.mrb[0].mxu0
    %v302 = vadd.f32 %v217, %v301
    %v303 = vpop.f32.mrb[0].mxu0
    %v304 = vpop.f32.mrb[0].mxu0
    %v305 = vpop.f32.mrb[0].mxu0
    %306 = vdwg.mxu0
    %v307 = vmax.f32 %v302, 0.0
    %v308 = vpack.c.bf16 %v307, %v307
    %v309 = vld [vmem:[#allocation8] sm:$0xf]
    %v310 = vld [vmem:[#allocation8 + $0x4] sm:$0xf]
    %v311 = vld [vmem:[#allocation8 + $0x8] sm:$0xf]
    %v312 = vld [vmem:[#allocation8 + $0xc] sm:$0xf]
    %v313 = vld [vmem:[#allocation8 + $0x10] sm:$0xf]
    %v314 = vld [vmem:[#allocation8 + $0x14] sm:$0xf]
    %v315 = vld [vmem:[#allocation8 + $0x18] sm:$0xf]
    %v316 = vld [vmem:[#allocation8 + $0x1c] sm:$0xf]
    %v317 = vld [vmem:[#allocation8 + $0x20] sm:$0xf]
    %v318 = vld [vmem:[#allocation8 + $0x24] sm:$0xf]
    %v319 = vld [vmem:[#allocation8 + $0x28] sm:$0xf]
    %v320 = vld [vmem:[#allocation8 + $0x2c] sm:$0xf]
    %v321 = vld [vmem:[#allocation8 + $0x30] sm:$0xf]
    %v322 = vld [vmem:[#allocation8 + $0x34] sm:$0xf]
    %v323 = vld [vmem:[#allocation8 + $0x38] sm:$0xf]
    %v324 = vld [vmem:[#allocation8 + $0x3c] sm:$0xf]
    %v325 = vld [vmem:[%s6] sm:$0x1]
    %v327 = vlaneseq
    %v328 = vshrl.u32 %v327, 7
    %v329 = vsub.s32 0, %v328
    %v330 = vrot.slane %v325, %v329
    %v348 = vunpack.c.l.b16 %v309
    %v349 = vunpack.c.l.b16 %v310
    %v350 = vunpack.c.l.b16 %v311
    %v351 = vunpack.c.l.b16 %v312
    %v352 = vunpack.c.l.b16 %v313
    %v353 = vunpack.c.l.b16 %v314
    %v354 = vunpack.c.l.b16 %v315
    %v355 = vunpack.c.l.b16 %v316
    %v356 = vunpack.c.l.b16 %v317
    %v357 = vunpack.c.l.b16 %v318
    %v358 = vunpack.c.l.b16 %v319
    %v359 = vunpack.c.l.b16 %v320
    %v360 = vunpack.c.l.b16 %v321
    %v361 = vunpack.c.l.b16 %v322
    %v362 = vunpack.c.l.b16 %v323
    %v363 = vunpack.c.l.b16 %v324
    %v364 = vpack.c.b16 %v349, %v348
    %v365 = vpack.c.b16 %v351, %v350
    %v366 = vpack.c.b16 %v353, %v352
    %v367 = vpack.c.b16 %v355, %v354
    %v368 = vpack.c.b16 %v357, %v356
    %v369 = vpack.c.b16 %v359, %v358
    %v370 = vpack.c.b16 %v361, %v360
    %v371 = vpack.c.b16 %v363, %v362
    %380 = vmatprep.subr.bf16.mxu0 0
    %381 = vmatpush1.bf16.msra.mxu0 %v364
    %382 = vmatprep.subr.bf16.mxu0 0
    %383 = vmatpush1.bf16.msra.mxu0 %v365
    %384 = vmatprep.subr.bf16.mxu0 0
    %385 = vmatpush1.bf16.msra.mxu0 %v366
    %386 = vmatprep.subr.bf16.mxu0 0
    %387 = vmatpush1.bf16.msra.mxu0 %v367
    %388 = vmatprep.subr.bf16.mxu0 0
    %389 = vmatpush1.bf16.msra.mxu0 %v368
    %390 = vmatprep.subr.bf16.mxu0 0
    %391 = vmatpush1.bf16.msra.mxu0 %v369
    %392 = vmatprep.subr.bf16.mxu0 0
    %393 = vmatpush1.bf16.msra.mxu0 %v370
    %394 = vmatprep.subr.bf16.mxu0 0
    %395 = vmatpush1.bf16.msra.mxu0 %v371
    %396 = vmatprep.subr.bf16.mxu0 0
    %397 = vmatpush1.bf16.msra.mxu0 0
    %398 = vmatprep.subr.bf16.mxu0 0
    %399 = vmatpush1.bf16.msra.mxu0 0
    %400 = vmatprep.subr.bf16.mxu0 0
    %401 = vmatpush1.bf16.msra.mxu0 0
    %402 = vmatprep.subr.bf16.mxu0 0
    %403 = vmatpush1.bf16.msra.mxu0 0
    %404 = vmatprep.subr.bf16.mxu0 0
    %405 = vmatpush1.bf16.msra.mxu0 0
    %406 = vmatprep.subr.bf16.mxu0 0
    %407 = vmatpush1.bf16.msra.mxu0 0
    %408 = vmatprep.subr.bf16.mxu0 0
    %409 = vmatpush1.bf16.msra.mxu0 0
    %410 = vmatprep.subr.bf16.mxu0 0
    %411 = vmatpush1.bf16.msra.mxu0 0
    %412 = vmatprep.mubr.bf16.mxu0 0
    %413 = vmatmul.mubr.bf16.gmra.mrb[0].mxu0 %v308
    %v414 = vpop.f32.mrb[0].mxu0
    %v415 = vadd.f32 %v330, %v414
    %v416 = vpop.f32.mrb[0].mxu0
    %v417 = vpop.f32.mrb[0].mxu0
    %v418 = vpop.f32.mrb[0].mxu0
    %419 = vdwg.mxu0
    %420 = vst [vmem:[#allocation10] sm:$0xff] %v415
    // Predicated region
    $region46: #{tpu_custom_call.1} parent=1 // pred_check
      _
    $region47: #{tpu_custom_call.1} parent=1 // pred_check_branch
      %422 = sbr.rel (0) target = $region49
    $region48: #{tpu_custom_call.1} parent=1 // pred_region
      %s424 = ssub.s32 128, 128
      %425 = vsyncadd [#allocation4], %s424
      %s427 = sshll.u32 [#allocation10], 4
      %s428 = int_to_ptr.vmem [resolvable:$true] %s427
      %430 = dma.vmem_to_hbm [thread:$0]  %s428, 128, %s7, [#allocation4]
    $region49: #{tpu_custom_call.1} parent=1 // pred_fallthru
      _
    // Predicated region
    $region50: #{tpu_custom_call.1} parent=1 // pred_check
      _
    $region51: #{tpu_custom_call.1} parent=1 // pred_check_branch
      %432 = sbr.rel (0) target = $region53
    $region52: #{tpu_custom_call.1} parent=1 // pred_region
      %433 = dma.done [#allocation4], 128
    $region53: #{tpu_custom_call.1} parent=1 // pred_fallthru
      _
    %434 = vsyncpa [#allocation3], 1
    %435 = vsyncpa [#allocation6], 1
    %436 = vsyncpa [#allocation9], 1
    %437 = vsyncpa [#allocation4], 1

// kernel: tpu_custom_call.1
$region0: #{tpu_custom_call.1}
  #allocation0 [shape = 'u32[]', space=smem, size = 0x4, offset = 0x4, fixed_abs, tag = 'smem constant byte address 0x4 - core index']
  #allocation1 [shape = 'u32[144,128]{1,0:T(1,128)}', space=vmem, size = 0x12000, scoped, tag = 'internal scratch']
  %s0 = inlined_call_operand.hbm [shape: f32[8,128], index: 0, kind: input, shape index: {}]
  %s1 = inlined_call_operand.hbm [shape: bf16[128,128], index: 1, kind: input, shape index: {}]
  %s2 = inlined_call_operand.vmem [shape: f32[1,128], index: 2, kind: input, shape index: {}]
  %s3 = inlined_call_operand.hbm [shape: bf16[128,128], index: 3, kind: input, shape index: {}]
  %s4 = inlined_call_operand.vmem [shape: f32[1,128], index: 4, kind: input, shape index: {}]
  %s5 = inlined_call_operand.hbm [shape: bf16[128,128], index: 5, kind: input, shape index: {}]
  %s6 = inlined_call_operand.vmem [shape: f32[1,128], index: 6, kind: input, shape index: {}]
  %s7 = inlined_call_operand.hbm [shape: f32[8,128], index: 7, kind: output, shape index: {}]
  %s8 = sld [smem:[#allocation0]]
  $region54: #{tpu_custom_call.1} parent=0
    _
  %s10 = ssub.s32 1, %s8
  %s11 = scalar_select 0, %s10, %s8
  $region1: #{tpu_custom_call.1} parent=0
    #allocation2 [shape = 'u8[4096]{0}', space=vmem, size = 0x1000, scoped, tag = 'input window, operand 0, single buffered']
    #allocation3 [shape = 's32[1]{0}', space=sflag, size = 0x4, scoped, tag = 'scoped memory for tpu_custom_call.1']
    #allocation4 [shape = 's32[1]{0}', space=sflag, size = 0x4, scoped, tag = 'scoped memory for tpu_custom_call.1']
    #allocation5 [shape = 'u8[32768]{0}', space=vmem, size = 0x8000, scoped, tag = 'input window, operand 1, single buffered']
    #allocation6 [shape = 's32[1]{0}', space=sflag, size = 0x4, scoped, tag = 'scoped memory for tpu_custom_call.1']
    #allocation7 [shape = 'u8[32768]{0}', space=vmem, size = 0x8000, scoped, tag = 'input window, operand 3, single buffered']
    #allocation8 [shape = 'u8[32768]{0}', space=vmem, size = 0x8000, scoped, tag = 'input window, operand 5, single buffered']
    #allocation9 [shape = 's32[1]{0}', space=sflag, size = 0x4, scoped, tag = 'scoped memory for tpu_custom_call.1']
    #allocation10 [shape = 'u8[4096]{0}', space=vmem, size = 0x1000, scoped, tag = 'output window, operand 0, single buffered']
    %12 = vsyncpa [#allocation3], 0
    %13 = vsyncpa [#allocation6], 0
    %14 = vsyncpa [#allocation9], 0
    %15 = vsyncpa [#allocation4], 0
    // Predicated region
    $region2: #{tpu_custom_call.1} parent=1 // pred_check
      _
    $region3: #{tpu_custom_call.1} parent=1 // pred_check_branch
      %17 = sbr.rel (0) target = $region5
    $region4: #{tpu_custom_call.1} parent=1 // pred_region
      %s19 = ssub.s32 128, 128
      %20 = vsyncadd [#allocation3], %s19
      %s22 = sshll.u32 [#allocation2], 4
      %s23 = int_to_ptr.vmem [resolvable:$true] %s22
      %25 = dma.hbm_to_vmem [thread:$0]  %s0, 128, %s23, [#allocation3]
    $region5: #{tpu_custom_call.1} parent=1 // pred_fallthru
      _
    // Predicated region
    $region6: #{tpu_custom_call.1} parent=1 // pred_check
      _
    $region7: #{tpu_custom_call.1} parent=1 // pred_check_branch
      %27 = sbr.rel (0) target = $region9
    $region8: #{tpu_custom_call.1} parent=1 // pred_region
      %s29 = ssub.s32 1024, 1024
      %30 = vsyncadd [#allocation6], %s29
      %s31 = sshll.u32 [#allocation5], 4
      %s32 = int_to_ptr.vmem [resolvable:$true] %s31
      %37 = dma.hbm_to_vmem [thread:$0]  %s1, 1024, %s32, [#allocation6], 64, 64, 4
    $region9: #{tpu_custom_call.1} parent=1 // pred_fallthru
      _
    // Predicated region
    $region10: #{tpu_custom_call.1} parent=1 // pred_check
      _
    $region11: #{tpu_custom_call.1} parent=1 // pred_check_branch
      %39 = sbr.rel (0) target = $region13
    $region12: #{tpu_custom_call.1} parent=1 // pred_region
      _
    $region13: #{tpu_custom_call.1} parent=1 // pred_fallthru
      _
    // Predicated region
    $region14: #{tpu_custom_call.1} parent=1 // pred_check
      _
    $region15: #{tpu_custom_call.1} parent=1 // pred_check_branch
      %41 = sbr.rel (0) target = $region17
    $region16: #{tpu_custom_call.1} parent=1 // pred_region
      %s43 = ssub.s32 1024, 1024
      %44 = vsyncadd [#allocation6], %s43
      %s45 = sshll.u32 [#allocation7], 4
      %s46 = int_to_ptr.vmem [resolvable:$true] %s45
      %51 = dma.hbm_to_vmem [thread:$0]  %s3, 1024, %s46, [#allocation6], 64, 64, 4
    $region17: #{tpu_custom_call.1} parent=1 // pred_fallthru
      _
    // Predicated region
    $region18: #{tpu_custom_call.1} parent=1 // pred_check
      _
    $region19: #{tpu_custom_call.1} parent=1 // pred_check_branch
      %53 = sbr.rel (0) target = $region21
    $region20: #{tpu_custom_call.1} parent=1 // pred_region
      _
    $region21: #{tpu_custom_call.1} parent=1 // pred_fallthru
      _
    // Predicated region
    $region22: #{tpu_custom_call.1} parent=1 // pred_check
      _
    $region23: #{tpu_custom_call.1} parent=1 // pred_check_branch
      %55 = sbr.rel (0) target = $region25
    $region24: #{tpu_custom_call.1} parent=1 // pred_region
      %s57 = ssub.s32 1024, 1024
      %58 = vsyncadd [#allocation9], %s57
      %s59 = sshll.u32 [#allocation8], 4
      %s60 = int_to_ptr.vmem [resolvable:$true] %s59
      %65 = dma.hbm_to_vmem [thread:$0]  %s5, 1024, %s60, [#allocation9], 64, 64, 4
    $region25: #{tpu_custom_call.1} parent=1 // pred_fallthru
      _
    // Predicated region
    $region26: #{tpu_custom_call.1} parent=1 // pred_check
      _
    $region27: #{tpu_custom_call.1} parent=1 // pred_check_branch
      %67 = sbr.rel (0) target = $region29
    $region28: #{tpu_custom_call.1} parent=1 // pred_region
      _
    $region29: #{tpu_custom_call.1} parent=1 // pred_fallthru
      _
    // Predicated region
    $region30: #{tpu_custom_call.1} parent=1 // pred_check
      _
    $region31: #{tpu_custom_call.1} parent=1 // pred_check_branch
      %69 = sbr.rel (0) target = $region33
    $region32: #{tpu_custom_call.1} parent=1 // pred_region
      %70 = dma.done [#allocation3], 128
    $region33: #{tpu_custom_call.1} parent=1 // pred_fallthru
      _
    // Predicated region
    $region34: #{tpu_custom_call.1} parent=1 // pred_check
      _
    $region35: #{tpu_custom_call.1} parent=1 // pred_check_branch
      %72 = sbr.rel (0) target = $region37
    $region36: #{tpu_custom_call.1} parent=1 // pred_region
      %73 = dma.done [#allocation6], 1024
    $region37: #{tpu_custom_call.1} parent=1 // pred_fallthru
      _
    // Predicated region
    $region38: #{tpu_custom_call.1} parent=1 // pred_check
      _
    $region39: #{tpu_custom_call.1} parent=1 // pred_check_branch
      %75 = sbr.rel (0) target = $region41
    $region40: #{tpu_custom_call.1} parent=1 // pred_region
      %76 = dma.done [#allocation6], 1024
    $region41: #{tpu_custom_call.1} parent=1 // pred_fallthru
      _
    // Predicated region
    $region42: #{tpu_custom_call.1} parent=1 // pred_check
      _
    $region43: #{tpu_custom_call.1} parent=1 // pred_check_branch
      %78 = sbr.rel (0) target = $region45
    $region44: #{tpu_custom_call.1} parent=1 // pred_region
      %79 = dma.done [#allocation9], 1024
    $region45: #{tpu_custom_call.1} parent=1 // pred_fallthru
      _
    %v81 = vld [vmem:[#allocation2] sm:$0xff]
    %v82 = vpack.c.bf16 %v81, %v81
    %v83 = vld [vmem:[#allocation5] sm:$0xf]
    %v84 = vld [vmem:[#allocation5 + $0x4] sm:$0xf]
    %v85 = vld [vmem:[#allocation5 + $0x8] sm:$0xf]
    %v86 = vld [vmem:[#allocation5 + $0xc] sm:$0xf]
    %v87 = vld [vmem:[#allocation5 + $0x10] sm:$0xf]
    %v88 = vld [vmem:[#allocation5 + $0x14] sm:$0xf]
    %v89 = vld [vmem:[#allocation5 + $0x18] sm:$0xf]
    %v90 = vld [vmem:[#allocation5 + $0x1c] sm:$0xf]
    %v91 = vld [vmem:[#allocation5 + $0x20] sm:$0xf]
    %v92 = vld [vmem:[#allocation5 + $0x24] sm:$0xf]
    %v93 = vld [vmem:[#allocation5 + $0x28] sm:$0xf]
    %v94 = vld [vmem:[#allocation5 + $0x2c] sm:$0xf]
    %v95 = vld [vmem:[#allocation5 + $0x30] sm:$0xf]
    %v96 = vld [vmem:[#allocation5 + $0x34] sm:$0xf]
    %v97 = vld [vmem:[#allocation5 + $0x38] sm:$0xf]
    %v98 = vld [vmem:[#allocation5 + $0x3c] sm:$0xf]
    %v99 = vld [vmem:[%s2] sm:$0x1]
    %v101 = vlaneseq
    %v102 = vshrl.u32 %v101, 7
    %v103 = vsub.s32 0, %v102
    %v104 = vrot.slane %v99, %v103
    %v122 = vunpack.c.l.b16 %v83
    %v123 = vunpack.c.l.b16 %v84
    %v124 = vunpack.c.l.b16 %v85
    %v125 = vunpack.c.l.b16 %v86
    %v126 = vunpack.c.l.b16 %v87
    %v127 = vunpack.c.l.b16 %v88
    %v128 = vunpack.c.l.b16 %v89
    %v129 = vunpack.c.l.b16 %v90
    %v130 = vunpack.c.l.b16 %v91
    %v131 = vunpack.c.l.b16 %v92
    %v132 = vunpack.c.l.b16 %v93
    %v133 = vunpack.c.l.b16 %v94
    %v134 = vunpack.c.l.b16 %v95
    %v135 = vunpack.c.l.b16 %v96
    %v136 = vunpack.c.l.b16 %v97
    %v137 = vunpack.c.l.b16 %v98
    %v138 = vpack.c.b16 %v123, %v122
    %v139 = vpack.c.b16 %v125, %v124
    %v140 = vpack.c.b16 %v127, %v126
    %v141 = vpack.c.b16 %v129, %v128
    %v142 = vpack.c.b16 %v131, %v130
    %v143 = vpack.c.b16 %v133, %v132
    %v144 = vpack.c.b16 %v135, %v134
    %v145 = vpack.c.b16 %v137, %v136
    %154 = vmatprep.subr.bf16.mxu0 0
    %155 = vmatpush1.bf16.msra.mxu0 %v138
    %156 = vmatprep.subr.bf16.mxu0 0
    %157 = vmatpush1.bf16.msra.mxu0 %v139
    %158 = vmatprep.subr.bf16.mxu0 0
    %159 = vmatpush1.bf16.msra.mxu0 %v140
    %160 = vmatprep.subr.bf16.mxu0 0
    %161 = vmatpush1.bf16.msra.mxu0 %v141
    %162 = vmatprep.subr.bf16.mxu0 0
    %163 = vmatpush1.bf16.msra.mxu0 %v142
    %164 = vmatprep.subr.bf16.mxu0 0
    %165 = vmatpush1.bf16.msra.mxu0 %v143
    %166 = vmatprep.subr.bf16.mxu0 0
    %167 = vmatpush1.bf16.msra.mxu0 %v144
    %168 = vmatprep.subr.bf16.mxu0 0
    %169 = vmatpush1.bf16.msra.mxu0 %v145
    %170 = vmatprep.subr.bf16.mxu0 0
    %171 = vmatpush1.bf16.msra.mxu0 0
    %172 = vmatprep.subr.bf16.mxu0 0
    %173 = vmatpush1.bf16.msra.mxu0 0
    %174 = vmatprep.subr.bf16.mxu0 0
    %175 = vmatpush1.bf16.msra.mxu0 0
    %176 = vmatprep.subr.bf16.mxu0 0
    %177 = vmatpush1.bf16.msra.mxu0 0
    %178 = vmatprep.subr.bf16.mxu0 0
    %179 = vmatpush1.bf16.msra.mxu0 0
    %180 = vmatprep.subr.bf16.mxu0 0
    %181 = vmatpush1.bf16.msra.mxu0 0
    %182 = vmatprep.subr.bf16.mxu0 0
    %183 = vmatpush1.bf16.msra.mxu0 0
    %184 = vmatprep.subr.bf16.mxu0 0
    %185 = vmatpush1.bf16.msra.mxu0 0
    %186 = vmatprep.mubr.bf16.mxu0 0
    %187 = vmatmul.mubr.bf16.gmra.mrb[0].mxu0 %v82
    %v188 = vpop.f32.mrb[0].mxu0
    %v189 = vadd.f32 %v104, %v188
    %v190 = vpop.f32.mrb[0].mxu0
    %v191 = vpop.f32.mrb[0].mxu0
    %v192 = vpop.f32.mrb[0].mxu0
    %193 = vdwg.mxu0
    %v194 = vmax.f32 %v189, 0.0
    %v195 = vpack.c.bf16 %v194, %v194
    %v196 = vld [vmem:[#allocation7] sm:$0xf]
    %v197 = vld [vmem:[#allocation7 + $0x4] sm:$0xf]
    %v198 = vld [vmem:[#allocation7 + $0x8] sm:$0xf]
    %v199 = vld [vmem:[#allocation7 + $0xc] sm:$0xf]
    %v200 = vld [vmem:[#allocation7 + $0x10] sm:$0xf]
    %v201 = vld [vmem:[#allocation7 + $0x14] sm:$0xf]
    %v202 = vld [vmem:[#allocation7 + $0x18] sm:$0xf]
    %v203 = vld [vmem:[#allocation7 + $0x1c] sm:$0xf]
    %v204 = vld [vmem:[#allocation7 + $0x20] sm:$0xf]
    %v205 = vld [vmem:[#allocation7 + $0x24] sm:$0xf]
    %v206 = vld [vmem:[#allocation7 + $0x28] sm:$0xf]
    %v207 = vld [vmem:[#allocation7 + $0x2c] sm:$0xf]
    %v208 = vld [vmem:[#allocation7 + $0x30] sm:$0xf]
    %v209 = vld [vmem:[#allocation7 + $0x34] sm:$0xf]
    %v210 = vld [vmem:[#allocation7 + $0x38] sm:$0xf]
    %v211 = vld [vmem:[#allocation7 + $0x3c] sm:$0xf]
    %v212 = vld [vmem:[%s4] sm:$0x1]
    %v214 = vlaneseq
    %v215 = vshrl.u32 %v214, 7
    %v216 = vsub.s32 0, %v215
    %v217 = vrot.slane %v212, %v216
    %v235 = vunpack.c.l.b16 %v196
    %v236 = vunpack.c.l.b16 %v197
    %v237 = vunpack.c.l.b16 %v198
    %v238 = vunpack.c.l.b16 %v199
    %v239 = vunpack.c.l.b16 %v200
    %v240 = vunpack.c.l.b16 %v201
    %v241 = vunpack.c.l.b16 %v202
    %v242 = vunpack.c.l.b16 %v203
    %v243 = vunpack.c.l.b16 %v204
    %v244 = vunpack.c.l.b16 %v205
    %v245 = vunpack.c.l.b16 %v206
    %v246 = vunpack.c.l.b16 %v207
    %v247 = vunpack.c.l.b16 %v208
    %v248 = vunpack.c.l.b16 %v209
    %v249 = vunpack.c.l.b16 %v210
    %v250 = vunpack.c.l.b16 %v211
    %v251 = vpack.c.b16 %v236, %v235
    %v252 = vpack.c.b16 %v238, %v237
    %v253 = vpack.c.b16 %v240, %v239
    %v254 = vpack.c.b16 %v242, %v241
    %v255 = vpack.c.b16 %v244, %v243
    %v256 = vpack.c.b16 %v246, %v245
    %v257 = vpack.c.b16 %v248, %v247
    %v258 = vpack.c.b16 %v250, %v249
    %267 = vmatprep.subr.bf16.mxu0 0
    %268 = vmatpush1.bf16.msra.mxu0 %v251
    %269 = vmatprep.subr.bf16.mxu0 0
    %270 = vmatpush1.bf16.msra.mxu0 %v252
    %271 = vmatprep.subr.bf16.mxu0 0
    %272 = vmatpush1.bf16.msra.mxu0 %v253
    %273 = vmatprep.subr.bf16.mxu0 0
    %274 = vmatpush1.bf16.msra.mxu0 %v254
    %275 = vmatprep.subr.bf16.mxu0 0
    %276 = vmatpush1.bf16.msra.mxu0 %v255
    %277 = vmatprep.subr.bf16.mxu0 0
    %278 = vmatpush1.bf16.msra.mxu0 %v256
    %279 = vmatprep.subr.bf16.mxu0 0
    %280 = vmatpush1.bf16.msra.mxu0 %v257
    %281 = vmatprep.subr.bf16.mxu0 0
    %282 = vmatpush1.bf16.msra.mxu0 %v258
    %283 = vmatprep.subr.bf16.mxu0 0
    %284 = vmatpush1.bf16.msra.mxu0 0
    %285 = vmatprep.subr.bf16.mxu0 0
    %286 = vmatpush1.bf16.msra.mxu0 0
    %287 = vmatprep.subr.bf16.mxu0 0
    %288 = vmatpush1.bf16.msra.mxu0 0
    %289 = vmatprep.subr.bf16.mxu0 0
    %290 = vmatpush1.bf16.msra.mxu0 0
    %291 = vmatprep.subr.bf16.mxu0 0
    %292 = vmatpush1.bf16.msra.mxu0 0
    %293 = vmatprep.subr.bf16.mxu0 0
    %294 = vmatpush1.bf16.msra.mxu0 0
    %295 = vmatprep.subr.bf16.mxu0 0
    %296 = vmatpush1.bf16.msra.mxu0 0
    %297 = vmatprep.subr.bf16.mxu0 0
    %298 = vmatpush1.bf16.msra.mxu0 0
    %299 = vmatprep.mubr.bf16.mxu0 0
    %300 = vmatmul.mubr.bf16.gmra.mrb[0].mxu0 %v195
    %v301 = vpop.f32.mrb[0].mxu0
    %v302 = vadd.f32 %v217, %v301
    %v303 = vpop.f32.mrb[0].mxu0
    %v304 = vpop.f32.mrb[0].mxu0
    %v305 = vpop.f32.mrb[0].mxu0
    %306 = vdwg.mxu0
    %v307 = vmax.f32 %v302, 0.0
    %v308 = vpack.c.bf16 %v307, %v307
    %v309 = vld [vmem:[#allocation8] sm:$0xf]
    %v310 = vld [vmem:[#allocation8 + $0x4] sm:$0xf]
    %v311 = vld [vmem:[#allocation8 + $0x8] sm:$0xf]
    %v312 = vld [vmem:[#allocation8 + $0xc] sm:$0xf]
    %v313 = vld [vmem:[#allocation8 + $0x10] sm:$0xf]
    %v314 = vld [vmem:[#allocation8 + $0x14] sm:$0xf]
    %v315 = vld [vmem:[#allocation8 + $0x18] sm:$0xf]
    %v316 = vld [vmem:[#allocation8 + $0x1c] sm:$0xf]
    %v317 = vld [vmem:[#allocation8 + $0x20] sm:$0xf]
    %v318 = vld [vmem:[#allocation8 + $0x24] sm:$0xf]
    %v319 = vld [vmem:[#allocation8 + $0x28] sm:$0xf]
    %v320 = vld [vmem:[#allocation8 + $0x2c] sm:$0xf]
    %v321 = vld [vmem:[#allocation8 + $0x30] sm:$0xf]
    %v322 = vld [vmem:[#allocation8 + $0x34] sm:$0xf]
    %v323 = vld [vmem:[#allocation8 + $0x38] sm:$0xf]
    %v324 = vld [vmem:[#allocation8 + $0x3c] sm:$0xf]
    %v325 = vld [vmem:[%s6] sm:$0x1]
    %v327 = vlaneseq
    %v328 = vshrl.u32 %v327, 7
    %v329 = vsub.s32 0, %v328
    %v330 = vrot.slane %v325, %v329
    %v348 = vunpack.c.l.b16 %v309
    %v349 = vunpack.c.l.b16 %v310
    %v350 = vunpack.c.l.b16 %v311
    %v351 = vunpack.c.l.b16 %v312
    %v352 = vunpack.c.l.b16 %v313
    %v353 = vunpack.c.l.b16 %v314
    %v354 = vunpack.c.l.b16 %v315
    %v355 = vunpack.c.l.b16 %v316
    %v356 = vunpack.c.l.b16 %v317
    %v357 = vunpack.c.l.b16 %v318
    %v358 = vunpack.c.l.b16 %v319
    %v359 = vunpack.c.l.b16 %v320
    %v360 = vunpack.c.l.b16 %v321
    %v361 = vunpack.c.l.b16 %v322
    %v362 = vunpack.c.l.b16 %v323
    %v363 = vunpack.c.l.b16 %v324
    %v364 = vpack.c.b16 %v349, %v348
    %v365 = vpack.c.b16 %v351, %v350
    %v366 = vpack.c.b16 %v353, %v352
    %v367 = vpack.c.b16 %v355, %v354
    %v368 = vpack.c.b16 %v357, %v356
    %v369 = vpack.c.b16 %v359, %v358
    %v370 = vpack.c.b16 %v361, %v360
    %v371 = vpack.c.b16 %v363, %v362
    %380 = vmatprep.subr.bf16.mxu0 0
    %381 = vmatpush1.bf16.msra.mxu0 %v364
    %382 = vmatprep.subr.bf16.mxu0 0
    %383 = vmatpush1.bf16.msra.mxu0 %v365
    %384 = vmatprep.subr.bf16.mxu0 0
    %385 = vmatpush1.bf16.msra.mxu0 %v366
    %386 = vmatprep.subr.bf16.mxu0 0
    %387 = vmatpush1.bf16.msra.mxu0 %v367
    %388 = vmatprep.subr.bf16.mxu0 0
    %389 = vmatpush1.bf16.msra.mxu0 %v368
    %390 = vmatprep.subr.bf16.mxu0 0
    %391 = vmatpush1.bf16.msra.mxu0 %v369
    %392 = vmatprep.subr.bf16.mxu0 0
    %393 = vmatpush1.bf16.msra.mxu0 %v370
    %394 = vmatprep.subr.bf16.mxu0 0
    %395 = vmatpush1.bf16.msra.mxu0 %v371
    %396 = vmatprep.subr.bf16.mxu0 0
    %397 = vmatpush1.bf16.msra.mxu0 0
    %398 = vmatprep.subr.bf16.mxu0 0
    %399 = vmatpush1.bf16.msra.mxu0 0
    %400 = vmatprep.subr.bf16.mxu0 0
    %401 = vmatpush1.bf16.msra.mxu0 0
    %402 = vmatprep.subr.bf16.mxu0 0
    %403 = vmatpush1.bf16.msra.mxu0 0
    %404 = vmatprep.subr.bf16.mxu0 0
    %405 = vmatpush1.bf16.msra.mxu0 0
    %406 = vmatprep.subr.bf16.mxu0 0
    %407 = vmatpush1.bf16.msra.mxu0 0
    %408 = vmatprep.subr.bf16.mxu0 0
    %409 = vmatpush1.bf16.msra.mxu0 0
    %410 = vmatprep.subr.bf16.mxu0 0
    %411 = vmatpush1.bf16.msra.mxu0 0
    %412 = vmatprep.mubr.bf16.mxu0 0
    %413 = vmatmul.mubr.bf16.gmra.mrb[0].mxu0 %v308
    %v414 = vpop.f32.mrb[0].mxu0
    %v415 = vadd.f32 %v330, %v414
    %v416 = vpop.f32.mrb[0].mxu0
    %v417 = vpop.f32.mrb[0].mxu0
    %v418 = vpop.f32.mrb[0].mxu0
    %419 = vdwg.mxu0
    %420 = vst [vmem:[#allocation10] sm:$0xff] %v415
    // Predicated region
    $region46: #{tpu_custom_call.1} parent=1 // pred_check
      _
    $region47: #{tpu_custom_call.1} parent=1 // pred_check_branch
      %422 = sbr.rel (0) target = $region49
    $region48: #{tpu_custom_call.1} parent=1 // pred_region
      %s424 = ssub.s32 128, 128
      %425 = vsyncadd [#allocation4], %s424
      %s427 = sshll.u32 [#allocation10], 4
      %s428 = int_to_ptr.vmem [resolvable:$true] %s427
      %430 = dma.vmem_to_hbm [thread:$0]  %s428, 128, %s7, [#allocation4]
    $region49: #{tpu_custom_call.1} parent=1 // pred_fallthru
      _
    // Predicated region
    $region50: #{tpu_custom_call.1} parent=1 // pred_check
      _
    $region51: #{tpu_custom_call.1} parent=1 // pred_check_branch
      %432 = sbr.rel (0) target = $region53
    $region52: #{tpu_custom_call.1} parent=1 // pred_region
      %433 = dma.done [#allocation4], 128
    $region53: #{tpu_custom_call.1} parent=1 // pred_fallthru
      _
    %434 = vsyncpa [#allocation3], 1
    %435 = vsyncpa [#allocation6], 1
    %436 = vsyncpa [#allocation9], 1
    %437 = vsyncpa [#allocation4], 1

</llo_original>
